<compile_context>
chip_gen: v7x
topology: tpu7x:2x2x1
jax: 0.10.0
libtpu: 0.0.40
codegen_flags: <defaults>
</compile_context>

<pallas_src>
import functools

import jax
import jax.numpy as jnp
from jax import lax
from jax.experimental import pallas as pl
from jax.experimental.pallas import tpu as pltpu


def _edge_kernel(m_ref, x_ref, o_ref, *, HWp, W):
    """m_ref: (4, HWp) f32 0/1 boundary masks; x_ref/o_ref: (B, HWp) f32."""
    x = x_ref[...]

    # Boundary-validity masks, broadcast over the image (sublane) axis.
    ml = m_ref[0:1, :]   # 1 where col > 0       (left neighbor valid)
    mr = m_ref[1:2, :]   # 1 where col < W-1     (right neighbor valid)
    mu = m_ref[2:3, :]   # 1 where row > 0       (up neighbor valid)
    md = m_ref[3:4, :]   # 1 where row < H-1     (down neighbor valid)

    # Horizontal pass: left + center + right (zero padding via mask-multiply).
    # pltpu.roll follows jnp.roll semantics: roll(x, s)[k] == x[(k - s) % n].
    left = pltpu.roll(x, shift=1, axis=1) * ml            # x[k-1]
    right = pltpu.roll(x, shift=HWp - 1, axis=1) * mr     # x[k+1]
    row_sum = left + x + right

    # Vertical pass: up + mid + down (one image row == W lanes).
    up = pltpu.roll(row_sum, shift=W, axis=1) * mu            # row_sum[k-W]
    down = pltpu.roll(row_sum, shift=HWp - W, axis=1) * md    # row_sum[k+W]
    box = up + row_sum + down

    # 8*center - (box - center) == 9*center - box
    o_ref[...] = (9.0 * x - box).astype(o_ref.dtype)


def edg_capture(x, *, block_images=None):
    """x: (N, 3, H, W) float -> (N, 3, H, W) float (depthwise 3x3 edge filter)."""
    N, C, H, W = x.shape
    assert C == 3, "Edg_Capture expects 3 input channels"
    NC = N * C
    HW = H * W

    # Free (layout-preserving) reshape: one image per row, lane-dense last dim.
    xf = x.reshape(NC, HW).astype(jnp.float32)

    # Pad the lane axis to a multiple of 128 so stores are unmasked/lane-dense.
    HWp = ((HW + 127) // 128) * 128
    if HWp != HW:
        xf = jnp.pad(xf, ((0, 0), (0, HWp - HW)))

    # Precomputed 0/1 boundary masks (tiny, one resident block for all steps).
    lane = jnp.arange(HWp, dtype=jnp.int32)
    col = lane % W
    valid = lane < HW
    masks = jnp.stack([
        ((col > 0) & valid).astype(jnp.float32),            # left valid
        ((col < W - 1) & valid).astype(jnp.float32),        # right valid
        ((lane >= W) & valid).astype(jnp.float32),          # up valid
        ((lane < (H - 1) * W) & valid).astype(jnp.float32), # down valid
    ], axis=0)

    # Block sizing: ~4 MiB f32 input per step; multiple-of-8 sublane blocks
    # (or the full dim); >= 2 grid steps when possible for megacore sharding.
    if block_images is None:
        B = max(8, (4 * 1024 * 1024) // (HWp * 4))
        if NC > 8:
            half = max(8, (pl.cdiv(NC, 2) // 8) * 8)
            B = min(B, half)
        B = min(B, NC)
    else:
        B = int(block_images)
        B = min(B, NC)
    if B != NC:
        B = max(8, (B // 8) * 8)   # (8,128) sublane divisibility
        B = min(B, NC)
    grid = (pl.cdiv(NC, B),)

    kernel = functools.partial(_edge_kernel, HWp=HWp, W=W)
    out = pl.pallas_call(
        kernel,
        out_shape=jax.ShapeDtypeStruct((NC, HWp), jnp.float32),
        grid_spec=pltpu.PrefetchScalarGridSpec(
            num_scalar_prefetch=0,
            grid=grid,
            in_specs=[
                pl.BlockSpec((4, HWp), lambda i: (0, 0)),   # masks (resident)
                pl.BlockSpec((B, HWp), lambda i: (i, 0)),
            ],
            out_specs=pl.BlockSpec((B, HWp), lambda i: (i, 0)),
        ),
        compiler_params=pltpu.CompilerParams(
            dimension_semantics=("parallel",),
            vmem_limit_bytes=48 * 1024 * 1024,
        ),
    )(masks, xf)

    if HWp != HW:
        out = out[:, :HW]
    return out.reshape(N, C, H, W).astype(x.dtype)


def _reference(x):
    # Pure-JAX reference: depthwise conv with the same fixed 3x3 kernel.
    k = jnp.array([[-1.0, -1.0, -1.0],
                   [-1.0, 8.0, -1.0],
                   [-1.0, -1.0, -1.0]], dtype=x.dtype)
    outs = []
    for c in range(x.shape[1]):
        xc = x[:, c:c + 1]  # (N,1,H,W)
        w = k[None, None]   # (1,1,3,3) OIHW
        oc = lax.conv_general_dilated(
            xc, w, window_strides=(1, 1), padding=((1, 1), (1, 1)),
            dimension_numbers=("NCHW", "OIHW", "NCHW"))
        outs.append(oc)
    return jnp.concatenate(outs, axis=1)


if __name__ == "__main__":
    key = jax.random.PRNGKey(0)
    x = jax.random.normal(key, (2, 3, 16, 16), dtype=jnp.float32)

    y = jax.block_until_ready(edg_capture(x))

    y_ref = _reference(x)
    assert y.shape == y_ref.shape
    assert jnp.allclose(y, y_ref, atol=1e-4, rtol=1e-4), \
        float(jnp.max(jnp.abs(y - y_ref)))

    print("KERNEL_OK")
</pallas_src>

<mosaic_0001>
module attributes {stable_mosaic.version = 11 : i64} {
  func.func @_edge_kernel(%arg0: i32, %arg1: memref<4x256xf32, #tpu.memory_space<vmem>>, %arg2: memref<6x256xf32, #tpu.memory_space<vmem>>, %arg3: memref<6x256xf32, #tpu.memory_space<vmem>>) attributes {dimension_semantics = [#tpu.dimension_semantics<parallel>], iteration_bounds = array<i64: 1>, scalar_prefetch = 0 : i64, scratch_operands = 0 : i64, tpu.core_type = #tpu.core_type<tc>, window_params = [{pipeline_mode = #tpu.pipeline_mode<synchronous>, transform_indices = @transform_0, window_bounds = array<i64: 4, 256>}, {transform_indices = @transform_1, window_bounds = array<i64: 6, 256>}, {transform_indices = @transform_2, window_bounds = array<i64: 6, 256>}]} {
    %c0 = arith.constant 0 : index
    %c0_0 = arith.constant 0 : index
    %0 = vector.load %arg2[%c0, %c0_0] : memref<6x256xf32, #tpu.memory_space<vmem>>, vector<6x256xf32>
    %c0_1 = arith.constant 0 : index
    %c0_2 = arith.constant 0 : index
    %1 = vector.load %arg1[%c0_1, %c0_2] : memref<4x256xf32, #tpu.memory_space<vmem>>, vector<1x256xf32>
    %c1 = arith.constant 1 : index
    %c0_3 = arith.constant 0 : index
    %2 = vector.load %arg1[%c1, %c0_3] : memref<4x256xf32, #tpu.memory_space<vmem>>, vector<1x256xf32>
    %c2 = arith.constant 2 : index
    %c0_4 = arith.constant 0 : index
    %3 = vector.load %arg1[%c2, %c0_4] : memref<4x256xf32, #tpu.memory_space<vmem>>, vector<1x256xf32>
    %c3 = arith.constant 3 : index
    %c0_5 = arith.constant 0 : index
    %4 = vector.load %arg1[%c3, %c0_5] : memref<4x256xf32, #tpu.memory_space<vmem>>, vector<1x256xf32>
    %c1_i32 = arith.constant 1 : i32
    %5 = tpu.dynamic_rotate %0 by %c1_i32 dim 1 : vector<6x256xf32>, i32 -> vector<6x256xf32>
    %6 = vector.broadcast %1 : vector<1x256xf32> to vector<6x256xf32>
    %7 = arith.mulf %5, %6 : vector<6x256xf32>
    %c255_i32 = arith.constant 255 : i32
    %8 = tpu.dynamic_rotate %0 by %c255_i32 dim 1 : vector<6x256xf32>, i32 -> vector<6x256xf32>
    %9 = vector.broadcast %2 : vector<1x256xf32> to vector<6x256xf32>
    %10 = arith.mulf %8, %9 : vector<6x256xf32>
    %11 = arith.addf %7, %0 : vector<6x256xf32>
    %12 = arith.addf %11, %10 : vector<6x256xf32>
    %c16_i32 = arith.constant 16 : i32
    %13 = tpu.dynamic_rotate %12 by %c16_i32 dim 1 : vector<6x256xf32>, i32 -> vector<6x256xf32>
    %14 = vector.broadcast %3 : vector<1x256xf32> to vector<6x256xf32>
    %15 = arith.mulf %13, %14 : vector<6x256xf32>
    %c240_i32 = arith.constant 240 : i32
    %16 = tpu.dynamic_rotate %12 by %c240_i32 dim 1 : vector<6x256xf32>, i32 -> vector<6x256xf32>
    %17 = vector.broadcast %4 : vector<1x256xf32> to vector<6x256xf32>
    %18 = arith.mulf %16, %17 : vector<6x256xf32>
    %19 = arith.addf %15, %12 : vector<6x256xf32>
    %20 = arith.addf %19, %18 : vector<6x256xf32>
    %cst = arith.constant 9.000000e+00 : f32
    %21 = vector.broadcast %cst : f32 to vector<6x256xf32>
    %22 = arith.mulf %21, %0 : vector<6x256xf32>
    %23 = arith.subf %22, %20 : vector<6x256xf32>
    %c0_6 = arith.constant 0 : index
    %c0_7 = arith.constant 0 : index
    %24 = vector.load %arg3[%c0_6, %c0_7] : memref<6x256xf32, #tpu.memory_space<vmem>>, vector<6x256xf32>
    tpu.vector_store %arg3[%c0_6, %c0_7], %23 {strides = array<i32>} : memref<6x256xf32, #tpu.memory_space<vmem>>, vector<6x256xf32>,
    return
  }
  func.func @transform_0(%arg0: i32) -> (i32, i32) {
    %c0_i32 = arith.constant 0 : i32
    %c0_i32_0 = arith.constant 0 : i32
    %c0_i32_1 = arith.constant 0 : i32
    return %c0_i32, %c0_i32_0 : i32, i32
  }
  func.func @transform_1(%arg0: i32) -> (i32, i32) {
    %c0_i32 = arith.constant 0 : i32
    %c0_i32_0 = arith.constant 0 : i32
    return %arg0, %c0_i32 : i32, i32
  }
  func.func @transform_2(%arg0: i32) -> (i32, i32) {
    %c0_i32 = arith.constant 0 : i32
    %c0_i32_0 = arith.constant 0 : i32
    return %arg0, %c0_i32 : i32, i32
  }
}

</mosaic_0001>

<llo_original>
// kernel: tpu_custom_call.1
$region0: #{tpu_custom_call.1}
  #allocation0 [shape = 'u32[]', space=smem, size = 0x4, offset = 0x4, fixed_abs, tag = 'smem constant byte address 0x4 - core index']
  #allocation1 [shape = 'u32[144,128]{1,0:T(1,128)}', space=vmem, size = 0x12000, scoped, tag = 'internal scratch']
  %s0 = inlined_call_operand.hbm [shape: f32[4,256], index: 0, kind: input, shape index: {}]
  %s1 = inlined_call_operand.hbm [shape: f32[6,256], index: 1, kind: input, shape index: {}]
  %s2 = inlined_call_operand.hbm [shape: f32[6,256], index: 2, kind: output, shape index: {}]
  %s3 = sld [smem:[#allocation0]]
  $region26: #{tpu_custom_call.1} parent=0
    _
  %s5 = ssub.s32 1, %s3
  %s6 = scalar_select 0, %s5, %s3
  $region1: #{tpu_custom_call.1} parent=0
    #allocation2 [shape = 'u8[4096]{0}', space=vmem, size = 0x1000, scoped, tag = 'input window, operand 0, single buffered']
    #allocation3 [shape = 's32[1]{0}', space=sflag, size = 0x4, scoped, tag = 'scoped memory for tpu_custom_call.1']
    #allocation4 [shape = 's32[1]{0}', space=sflag, size = 0x4, scoped, tag = 'scoped memory for tpu_custom_call.1']
    #allocation5 [shape = 'u8[8192]{0}', space=vmem, size = 0x2000, scoped, tag = 'input window, operand 1, single buffered']
    #allocation6 [shape = 's32[1]{0}', space=sflag, size = 0x4, scoped, tag = 'scoped memory for tpu_custom_call.1']
    #allocation7 [shape = 'u8[8192]{0}', space=vmem, size = 0x2000, scoped, tag = 'output window, operand 0, single buffered']
    %7 = vsyncpa [#allocation3], 0
    %8 = vsyncpa [#allocation6], 0
    %9 = vsyncpa [#allocation4], 0
    // Predicated region
    $region2: #{tpu_custom_call.1} parent=1 // pred_check
      _
    $region3: #{tpu_custom_call.1} parent=1 // pred_check_branch
      %11 = sbr.rel (0) target = $region5
    $region4: #{tpu_custom_call.1} parent=1 // pred_region
      %s13 = ssub.s32 128, 128
      %14 = vsyncadd [#allocation3], %s13
      %s16 = sshll.u32 [#allocation2], 4
      %s17 = int_to_ptr.vmem [resolvable:$true] %s16
      %19 = dma.hbm_to_vmem [thread:$0]  %s0, 128, %s17, [#allocation3]
    $region5: #{tpu_custom_call.1} parent=1 // pred_fallthru
      _
    // Predicated region
    $region6: #{tpu_custom_call.1} parent=1 // pred_check
      _
    $region7: #{tpu_custom_call.1} parent=1 // pred_check_branch
      %21 = sbr.rel (0) target = $region9
    $region8: #{tpu_custom_call.1} parent=1 // pred_region
      %s23 = ssub.s32 256, 256
      %24 = vsyncadd [#allocation6], %s23
      %s26 = sshll.u32 [#allocation5], 4
      %s27 = int_to_ptr.vmem [resolvable:$true] %s26
      %29 = dma.hbm_to_vmem [thread:$0]  %s1, 256, %s27, [#allocation6]
    $region9: #{tpu_custom_call.1} parent=1 // pred_fallthru
      _
    // Predicated region
    $region10: #{tpu_custom_call.1} parent=1 // pred_check
      _
    $region11: #{tpu_custom_call.1} parent=1 // pred_check_branch
      %31 = sbr.rel (0) target = $region13
    $region12: #{tpu_custom_call.1} parent=1 // pred_region
      %32 = dma.done [#allocation3], 128
    $region13: #{tpu_custom_call.1} parent=1 // pred_fallthru
      _
    // Predicated region
    $region14: #{tpu_custom_call.1} parent=1 // pred_check
      _
    $region15: #{tpu_custom_call.1} parent=1 // pred_check_branch
      %34 = sbr.rel (0) target = $region17
    $region16: #{tpu_custom_call.1} parent=1 // pred_region
      %35 = dma.done [#allocation6], 256
    $region17: #{tpu_custom_call.1} parent=1 // pred_fallthru
      _
    %v36 = vld [vmem:[#allocation5] sm:$0x3f]
    %v37 = vld [vmem:[#allocation5 + $0x8] sm:$0x3f]
    %v38 = vld [vmem:[#allocation2] ss:$4 sm:$0x3]
    %s39 = scalar_lea.vmem [#allocation2], 1
    %v40 = vld [vmem:[%s39] ss:$4 sm:$0x3]
    %s41 = scalar_lea.vmem [#allocation2], 2
    %v42 = vld [vmem:[%s41] ss:$4 sm:$0x3]
    %s43 = scalar_lea.vmem [#allocation2], 3
    %v44 = vld [vmem:[%s43] ss:$4 sm:$0x3]
    %45 = vrot.lane.b32.xlu0 %v36, 1
    %v46 = vpop.permute.xlu0 %45
    %47 = vrot.lane.b32.xlu0 %v37, 1
    %v48 = vpop.permute.xlu0 %47
    %v49 = vlaneseq
    %v50 = vand.u32 %v49, 127
    %vm51 = vcmp.lt.s32.totalorder %v50, 1
    %v52 = vsel %vm51, %v46, %v48
    %v53 = vsel %vm51, %v48, %v46
    %v55 = vlaneseq
    %v56 = vshrl.u32 %v55, 7
    %v57 = vsub.s32 0, %v56
    %v58 = vrot.slane %v38, %v57
    %v59 = vlaneseq
    %v60 = vshrl.u32 %v59, 7
    %v61 = vsub.s32 1, %v60
    %v62 = vrot.slane %v38, %v61
    %v65 = vmul.f32 %v53, %v58
    %v66 = vmul.f32 %v52, %v62
    %67 = vrot.lane.b32.xlu0 %v36, 127
    %v68 = vpop.permute.xlu0 %67
    %69 = vrot.lane.b32.xlu0 %v37, 127
    %v70 = vpop.permute.xlu0 %69
    %vm71 = vcmp.lt.s32.totalorder %v50, 127
    %v72 = vsel %vm71, %v68, %v70
    %v73 = vsel %vm71, %v70, %v68
    %v75 = vlaneseq
    %v76 = vshrl.u32 %v75, 7
    %v77 = vsub.s32 0, %v76
    %v78 = vrot.slane %v40, %v77
    %v79 = vlaneseq
    %v80 = vshrl.u32 %v79, 7
    %v81 = vsub.s32 1, %v80
    %v82 = vrot.slane %v40, %v81
    %v85 = vmul.f32 %v72, %v78
    %v86 = vmul.f32 %v73, %v82
    %v87 = vadd.f32 %v65, %v36
    %v88 = vadd.f32 %v66, %v37
    %v89 = vadd.f32 %v87, %v85
    %v90 = vadd.f32 %v88, %v86
    %91 = vrot.lane.b32.xlu0 %v89, 16
    %v92 = vpop.permute.xlu0 %91
    %93 = vrot.lane.b32.xlu0 %v90, 16
    %v94 = vpop.permute.xlu0 %93
    %vm95 = vcmp.lt.s32.totalorder %v50, 16
    %v96 = vsel %vm95, %v92, %v94
    %v97 = vsel %vm95, %v94, %v92
    %v99 = vlaneseq
    %v100 = vshrl.u32 %v99, 7
    %v101 = vsub.s32 0, %v100
    %v102 = vrot.slane %v42, %v101
    %v103 = vlaneseq
    %v104 = vshrl.u32 %v103, 7
    %v105 = vsub.s32 1, %v104
    %v106 = vrot.slane %v42, %v105
    %v109 = vmul.f32 %v97, %v102
    %v110 = vmul.f32 %v96, %v106
    %111 = vrot.lane.b32.xlu0 %v89, 112
    %v112 = vpop.permute.xlu0 %111
    %113 = vrot.lane.b32.xlu0 %v90, 112
    %v114 = vpop.permute.xlu0 %113
    %vm115 = vcmp.lt.s32.totalorder %v50, 112
    %v116 = vsel %vm115, %v112, %v114
    %v117 = vsel %vm115, %v114, %v112
    %v119 = vlaneseq
    %v120 = vshrl.u32 %v119, 7
    %v121 = vsub.s32 0, %v120
    %v122 = vrot.slane %v44, %v121
    %v123 = vlaneseq
    %v124 = vshrl.u32 %v123, 7
    %v125 = vsub.s32 1, %v124
    %v126 = vrot.slane %v44, %v125
    %v129 = vmul.f32 %v116, %v122
    %v130 = vmul.f32 %v117, %v126
    %v131 = vadd.f32 %v109, %v89
    %v132 = vadd.f32 %v110, %v90
    %v133 = vadd.f32 %v131, %v129
    %v134 = vadd.f32 %v132, %v130
    %v135 = vmul.f32 %v36, 9.0
    %v136 = vmul.f32 %v37, 9.0
    %v137 = vsub.f32 %v135, %v133
    %v138 = vsub.f32 %v136, %v134
    %139 = vst [vmem:[#allocation7] sm:$0x3f] %v137
    %140 = vst [vmem:[#allocation7 + $0x8] sm:$0x3f] %v138
    // Predicated region
    $region18: #{tpu_custom_call.1} parent=1 // pred_check
      _
    $region19: #{tpu_custom_call.1} parent=1 // pred_check_branch
      %142 = sbr.rel (0) target = $region21
    $region20: #{tpu_custom_call.1} parent=1 // pred_region
      %s144 = ssub.s32 256, 256
      %145 = vsyncadd [#allocation4], %s144
      %s147 = sshll.u32 [#allocation7], 4
      %s148 = int_to_ptr.vmem [resolvable:$true] %s147
      %150 = dma.vmem_to_hbm [thread:$0]  %s148, 256, %s2, [#allocation4]
    $region21: #{tpu_custom_call.1} parent=1 // pred_fallthru
      _
    // Predicated region
    $region22: #{tpu_custom_call.1} parent=1 // pred_check
      _
    $region23: #{tpu_custom_call.1} parent=1 // pred_check_branch
      %152 = sbr.rel (0) target = $region25
    $region24: #{tpu_custom_call.1} parent=1 // pred_region
      %153 = dma.done [#allocation4], 256
    $region25: #{tpu_custom_call.1} parent=1 // pred_fallthru
      _
    %154 = vsyncpa [#allocation3], 1
    %155 = vsyncpa [#allocation6], 1
    %156 = vsyncpa [#allocation4], 1

</llo_original>
